<compile_context>
chip_gen: v6e
topology: v6e:2x2x1
jax: 0.10.0
libtpu: 0.0.40
codegen_flags: <defaults>
</compile_context>

<pallas_src>
import functools

import jax
import jax.numpy as jnp
from jax.experimental import pallas as pl
from jax.experimental.pallas import tpu as pltpu


def _myloss1_kernel(scal_ref, nvalid_ref, pred_ref, sum_ref, cnt_ref, *,
                    tiles_per_split):
    # scal_ref  : SMEM f32[3]  = [dmax, pos_x * 6.0, pos_y * 0.6]
    # nvalid_ref: SMEM i32[1]  = [2 * N]   (# of real, un-padded elements)
    # pred_ref  : VMEM f32[tile_m, 128]    interleaved x/y slab tile
    # sum_ref   : VMEM f32[1, 1, 128]      per-lane partial sum   (resident)
    # cnt_ref   : VMEM f32[1, 1, 128]      per-lane partial count (resident)
    c = pl.program_id(0)            # "parallel" split axis (megacore on v7x)
    i = pl.program_id(1)            # "arbitrary" streaming / reduction axis

    @pl.when(i == 0)
    def _init():
        sum_ref[...] = jnp.zeros_like(sum_ref)
        cnt_ref[...] = jnp.zeros_like(cnt_ref)

    tile_m, lanes = pred_ref.shape

    dmax = scal_ref[0]
    pos_x = scal_ref[1]             # pos[0] * 10 * 0.6 (precomputed once)
    pos_y = scal_ref[2]             # pos[1] *  1 * 0.6
    n_valid = nvalid_ref[0]

    row = jax.lax.broadcasted_iota(jnp.int32, (tile_m, lanes), 0)
    lane = jax.lax.broadcasted_iota(jnp.int32, (tile_m, lanes), 1)
    is_x = (lane & 1) == 0          # even lanes hold x, odd lanes hold y

    # Fused per-lane scale / offset (pure VPU, no captured array constants).
    scale = jnp.where(is_x, jnp.float32(6.0), jnp.float32(0.6))
    offset = jnp.where(is_x, pos_x, pos_y)

    diff = pred_ref[...] * scale - offset + jnp.float32(1e-6)  # pairwise eps
    d2 = diff * diff

    # Pair each even (x^2) lane with its odd (y^2) neighbour: a single lane
    # rotation; odd/wrap lanes are discarded by the mask below.
    neigh = jnp.roll(d2, shift=-1, axis=-1)          # neigh[j] = d2[j + 1]
    dist = jnp.sqrt(d2 + neigh)                      # per-point L2 distance
    n = jnp.maximum(dist - dmax, jnp.float32(0.0))   # hinge / ReLU

    # One lane per real (un-padded) point: even lanes with element idx < 2N.
    g_elem = ((c * tiles_per_split + i) * tile_m + row) * lanes + lane
    valid = jnp.logical_and(is_x, g_elem < n_valid)

    n_m = jnp.where(valid, n, jnp.float32(0.0))
    c_m = (n_m > jnp.float32(0.0)).astype(jnp.float32)

    sum_ref[...] += jnp.sum(n_m, axis=0, keepdims=True)[None]
    cnt_ref[...] += jnp.sum(c_m, axis=0, keepdims=True)[None]


@functools.partial(jax.jit, static_argnames=("max_tile_rows", "num_splits"))
def myloss1(pred, pos, dmax, *, max_tile_rows=1024, num_splits=2):
    """pred: (N, 2), pos: (2,), dmax: scalar  ->  scalar f32 loss."""
    pred = jnp.asarray(pred, jnp.float32)
    pos = jnp.asarray(pos, jnp.float32).reshape(2)
    dmax = jnp.asarray(dmax, jnp.float32)

    n_pts = pred.shape[0]
    lanes = 128
    total = 2 * n_pts                                  # interleaved x/y elems

    rows = max(1, pl.cdiv(total, lanes))
    tile_m = min(max_tile_rows, max(8, ((rows + 7) // 8) * 8))
    tiles_per_split = pl.cdiv(pl.cdiv(rows, tile_m), num_splits)
    m_rows = num_splits * tiles_per_split * tile_m     # grid-covered row count

    flat = pred.reshape(-1)                            # free: (N,2) -> (2N,)
    pad = m_rows * lanes - total
    if pad:                                            # only when shapes demand
        flat = jnp.pad(flat, (0, pad))
    slab = flat.reshape(m_rows, lanes)                 # free, lane-dense layout

    scal = jnp.stack([dmax, pos[0] * 6.0, pos[1] * 0.6])
    nvalid = jnp.array([total], dtype=jnp.int32)

    kernel = functools.partial(_myloss1_kernel, tiles_per_split=tiles_per_split)

    psum, pcnt = pl.pallas_call(
        kernel,
        grid=(num_splits, tiles_per_split),
        in_specs=[
            pl.BlockSpec(memory_space=pltpu.MemorySpace.SMEM),   # scal  (3,)
            pl.BlockSpec(memory_space=pltpu.MemorySpace.SMEM),   # nvalid (1,)
            pl.BlockSpec((tile_m, lanes),
                         lambda c, i: (c * tiles_per_split + i, 0)),
        ],
        out_specs=(
            pl.BlockSpec((1, 1, lanes), lambda c, i: (c, 0, 0)),
            pl.BlockSpec((1, 1, lanes), lambda c, i: (c, 0, 0)),
        ),
        out_shape=(
            jax.ShapeDtypeStruct((num_splits, 1, lanes), jnp.float32),
            jax.ShapeDtypeStruct((num_splits, 1, lanes), jnp.float32),
        ),
        compiler_params=pltpu.CompilerParams(
            dimension_semantics=("parallel", "arbitrary")),
    )(scal, nvalid, slab)

    total_sum = jnp.sum(psum)
    total_cnt = jnp.sum(pcnt)
    return total_sum / (total_cnt + 0.01)


def _reference(pred, pos, dmax):
    # Pure-JAX mirror of the torch module.
    scale = jnp.array([10.0 * 0.6, 1.0 * 0.6], dtype=jnp.float32)
    pred_t = pred.astype(jnp.float32) * scale
    pos_t = pos.astype(jnp.float32).reshape(1, 2) * scale
    diff = (pred_t - pos_t) + 1e-6
    temp = jnp.sqrt(jnp.sum(diff * diff, axis=1))
    n = jnp.maximum(temp - dmax, 0.0)
    return jnp.sum(n) / (jnp.sum(n != 0).astype(jnp.float32) + 0.01)


if __name__ == "__main__":
    key = jax.random.PRNGKey(0)
    k1, k2 = jax.random.split(key)

    N = 517                       # odd + partial 128-lane row: exercises masking
    pred = jax.random.normal(k1, (N, 2), dtype=jnp.float32)   # predicted (x, y)
    pos = jax.random.normal(k2, (2,), dtype=jnp.float32)      # target (x, y)
    dmax = jnp.float32(0.5)

    loss = jax.block_until_ready(myloss1(pred, pos, dmax))
    ref = jax.block_until_ready(_reference(pred, pos, dmax))

    assert jnp.allclose(loss, ref, rtol=1e-4, atol=1e-5), (loss, ref)
    print("KERNEL_OK")
</pallas_src>

<mosaic_0001>
module attributes {stable_mosaic.version = 11 : i64} {
  func.func @_myloss1_kernel(%arg0: i32, %arg1: i32, %arg2: memref<3xf32, #tpu.memory_space<smem>>, %arg3: memref<1xi32, #tpu.memory_space<smem>>, %arg4: memref<16x128xf32, #tpu.memory_space<vmem>>, %arg5: memref<1x1x128xf32, #tpu.memory_space<vmem>>, %arg6: memref<1x1x128xf32, #tpu.memory_space<vmem>>) attributes {dimension_semantics = [#tpu.dimension_semantics<parallel>, #tpu.dimension_semantics<arbitrary>], iteration_bounds = array<i64: 2, 1>, scalar_prefetch = 0 : i64, scratch_operands = 0 : i64, tpu.core_type = #tpu.core_type<tc>, window_params = [{transform_indices = @transform_0, window_bounds = array<i64: 3>}, {transform_indices = @transform_1, window_bounds = array<i64: 1>}, {transform_indices = @transform_2, window_bounds = array<i64: 16, 128>}, {transform_indices = @transform_3, window_bounds = array<i64: 1, 1, 128>}, {transform_indices = @transform_4, window_bounds = array<i64: 1, 1, 128>}]} {
    %c0_i32 = arith.constant 0 : i32
    %0 = arith.cmpi eq, %arg1, %c0_i32 : i32
    %1 = arith.extui %0 : i1 to i32
    %c0_i32_0 = arith.constant 0 : i32
    %2 = arith.cmpi ne, %1, %c0_i32_0 : i32
    scf.if %2 {
      %cst_25 = arith.constant 0.000000e+00 : f32
      %63 = vector.broadcast %cst_25 : f32 to vector<1x1x128xf32>
      %c0_26 = arith.constant 0 : index
      %c0_27 = arith.constant 0 : index
      %c0_28 = arith.constant 0 : index
      %64 = vector.load %arg5[%c0_26, %c0_27, %c0_28] : memref<1x1x128xf32, #tpu.memory_space<vmem>>, vector<1x1x128xf32>
      tpu.vector_store %arg5[%c0_26, %c0_27, %c0_28], %63 {strides = array<i32>} : memref<1x1x128xf32, #tpu.memory_space<vmem>>, vector<1x1x128xf32>,
      %cst_29 = arith.constant 0.000000e+00 : f32
      %65 = vector.broadcast %cst_29 : f32 to vector<1x1x128xf32>
      %c0_30 = arith.constant 0 : index
      %c0_31 = arith.constant 0 : index
      %c0_32 = arith.constant 0 : index
      %66 = vector.load %arg6[%c0_30, %c0_31, %c0_32] : memref<1x1x128xf32, #tpu.memory_space<vmem>>, vector<1x1x128xf32>
      tpu.vector_store %arg6[%c0_30, %c0_31, %c0_32], %65 {strides = array<i32>} : memref<1x1x128xf32, #tpu.memory_space<vmem>>, vector<1x1x128xf32>,
    } else {
    }
    %c0 = arith.constant 0 : index
    %3 = memref.load %arg2[%c0] : memref<3xf32, #tpu.memory_space<smem>>
    %c1 = arith.constant 1 : index
    %4 = memref.load %arg2[%c1] : memref<3xf32, #tpu.memory_space<smem>>
    %c2 = arith.constant 2 : index
    %5 = memref.load %arg2[%c2] : memref<3xf32, #tpu.memory_space<smem>>
    %c0_1 = arith.constant 0 : index
    %6 = memref.load %arg3[%c0_1] : memref<1xi32, #tpu.memory_space<smem>>
    %7 = tpu.iota {dimensions = array<i32: 0>} : vector<16x128xi32>
    %8 = tpu.iota {dimensions = array<i32: 1>} : vector<16x128xi32>
    %c1_i32 = arith.constant 1 : i32
    %9 = vector.broadcast %c1_i32 : i32 to vector<16x128xi32>
    %10 = arith.andi %8, %9 : vector<16x128xi32>
    %c0_i32_2 = arith.constant 0 : i32
    %11 = vector.broadcast %c0_i32_2 : i32 to vector<16x128xi32>
    %12 = arith.cmpi eq, %10, %11 : vector<16x128xi32>
    %cst = arith.constant 6.000000e+00 : f32
    %cst_3 = arith.constant 6.000000e-01 : f32
    %13 = vector.broadcast %cst : f32 to vector<16x128xf32>
    %14 = vector.broadcast %cst_3 : f32 to vector<16x128xf32>
    %15 = arith.select %12, %13, %14 : vector<16x128xi1>, vector<16x128xf32>
    %16 = vector.broadcast %4 : f32 to vector<16x128xf32>
    %17 = vector.broadcast %5 : f32 to vector<16x128xf32>
    %18 = arith.select %12, %16, %17 : vector<16x128xi1>, vector<16x128xf32>
    %c0_4 = arith.constant 0 : index
    %c0_5 = arith.constant 0 : index
    %19 = vector.load %arg4[%c0_4, %c0_5] : memref<16x128xf32, #tpu.memory_space<vmem>>, vector<16x128xf32>
    %20 = arith.mulf %19, %15 : vector<16x128xf32>
    %21 = arith.subf %20, %18 : vector<16x128xf32>
    %cst_6 = arith.constant 9.99999997E-7 : f32
    %22 = vector.broadcast %cst_6 : f32 to vector<16x128xf32>
    %23 = arith.addf %21, %22 : vector<16x128xf32>
    %24 = arith.mulf %23, %23 : vector<16x128xf32>
    %25 = vector.extract_strided_slice %24 {offsets = [0, 1], sizes = [16, 127], strides = [1, 1]} : vector<16x128xf32> to vector<16x127xf32>
    %26 = vector.extract_strided_slice %24 {offsets = [0, 0], sizes = [16, 1], strides = [1, 1]} : vector<16x128xf32> to vector<16x1xf32>
    %27 = tpu.concatenate %25, %26 in 1 : vector<16x127xf32>, vector<16x1xf32> -> vector<16x128xf32>
    %28 = arith.addf %24, %27 : vector<16x128xf32>
    %29 = math.sqrt %28 : vector<16x128xf32>
    %30 = vector.broadcast %3 : f32 to vector<16x128xf32>
    %31 = arith.subf %29, %30 : vector<16x128xf32>
    %cst_7 = arith.constant 0.000000e+00 : f32
    %32 = vector.broadcast %cst_7 : f32 to vector<16x128xf32>
    %33 = arith.maximumf %31, %32 : vector<16x128xf32>
    %c1_i32_8 = arith.constant 1 : i32
    %34 = arith.muli %arg0, %c1_i32_8 : i32
    %35 = arith.addi %34, %arg1 : i32
    %c16_i32 = arith.constant 16 : i32
    %36 = arith.muli %35, %c16_i32 : i32
    %37 = vector.broadcast %36 : i32 to vector<16x128xi32>
    %38 = arith.addi %37, %7 : vector<16x128xi32>
    %c128_i32 = arith.constant 128 : i32
    %39 = vector.broadcast %c128_i32 : i32 to vector<16x128xi32>
    %40 = arith.muli %38, %39 : vector<16x128xi32>
    %41 = arith.addi %40, %8 : vector<16x128xi32>
    %42 = vector.broadcast %6 : i32 to vector<16x128xi32>
    %43 = arith.cmpi slt, %41, %42 : vector<16x128xi32>
    %44 = arith.andi %12, %43 : vector<16x128xi1>
    %cst_9 = arith.constant 0.000000e+00 : f32
    %45 = vector.broadcast %cst_9 : f32 to vector<16x128xf32>
    %46 = arith.select %44, %33, %45 : vector<16x128xi1>, vector<16x128xf32>
    %cst_10 = arith.constant 0.000000e+00 : f32
    %47 = vector.broadcast %cst_10 : f32 to vector<16x128xf32>
    %48 = arith.cmpf ogt, %46, %47 : vector<16x128xf32>
    %49 = arith.extui %48 : vector<16x128xi1> to vector<16x128xi32>
    %50 = arith.sitofp %49 : vector<16x128xi32> to vector<16x128xf32>
    %c0_11 = arith.constant 0 : index
    %c0_12 = arith.constant 0 : index
    %c0_13 = arith.constant 0 : index
    %51 = vector.load %arg5[%c0_11, %c0_12, %c0_13] : memref<1x1x128xf32, #tpu.memory_space<vmem>>, vector<1x1x128xf32>
    %cst_14 = arith.constant dense<0.000000e+00> : vector<128xf32>
    %52 = vector.multi_reduction <add>, %46, %cst_14 [0] : vector<16x128xf32> to vector<128xf32>
    %53 = vector.shape_cast %52 : vector<128xf32> to vector<1x128xf32>
    %54 = vector.shape_cast %53 : vector<1x128xf32> to vector<1x1x128xf32>
    %55 = arith.addf %51, %54 : vector<1x1x128xf32>
    %c0_15 = arith.constant 0 : index
    %c0_16 = arith.constant 0 : index
    %c0_17 = arith.constant 0 : index
    %56 = vector.load %arg5[%c0_15, %c0_16, %c0_17] : memref<1x1x128xf32, #tpu.memory_space<vmem>>, vector<1x1x128xf32>
    tpu.vector_store %arg5[%c0_15, %c0_16, %c0_17], %55 {strides = array<i32>} : memref<1x1x128xf32, #tpu.memory_space<vmem>>, vector<1x1x128xf32>,
    %c0_18 = arith.constant 0 : index
    %c0_19 = arith.constant 0 : index
    %c0_20 = arith.constant 0 : index
    %57 = vector.load %arg6[%c0_18, %c0_19, %c0_20] : memref<1x1x128xf32, #tpu.memory_space<vmem>>, vector<1x1x128xf32>
    %cst_21 = arith.constant dense<0.000000e+00> : vector<128xf32>
    %58 = vector.multi_reduction <add>, %50, %cst_21 [0] : vector<16x128xf32> to vector<128xf32>
    %59 = vector.shape_cast %58 : vector<128xf32> to vector<1x128xf32>
    %60 = vector.shape_cast %59 : vector<1x128xf32> to vector<1x1x128xf32>
    %61 = arith.addf %57, %60 : vector<1x1x128xf32>
    %c0_22 = arith.constant 0 : index
    %c0_23 = arith.constant 0 : index
    %c0_24 = arith.constant 0 : index
    %62 = vector.load %arg6[%c0_22, %c0_23, %c0_24] : memref<1x1x128xf32, #tpu.memory_space<vmem>>, vector<1x1x128xf32>
    tpu.vector_store %arg6[%c0_22, %c0_23, %c0_24], %61 {strides = array<i32>} : memref<1x1x128xf32, #tpu.memory_space<vmem>>, vector<1x1x128xf32>,
    return
  }
  func.func @transform_0(%arg0: i32, %arg1: i32) -> i32 {
    %c0_i32 = arith.constant 0 : i32
    %c0_i32_0 = arith.constant 0 : i32
    return %c0_i32 : i32
  }
  func.func @transform_1(%arg0: i32, %arg1: i32) -> i32 {
    %c0_i32 = arith.constant 0 : i32
    %c0_i32_0 = arith.constant 0 : i32
    return %c0_i32 : i32
  }
  func.func @transform_2(%arg0: i32, %arg1: i32) -> (i32, i32) {
    %c1_i32 = arith.constant 1 : i32
    %0 = arith.muli %arg0, %c1_i32 : i32
    %1 = arith.addi %0, %arg1 : i32
    %c0_i32 = arith.constant 0 : i32
    %c0_i32_0 = arith.constant 0 : i32
    return %1, %c0_i32 : i32, i32
  }
  func.func @transform_3(%arg0: i32, %arg1: i32) -> (i32, i32, i32) {
    %c0_i32 = arith.constant 0 : i32
    %c0_i32_0 = arith.constant 0 : i32
    %c0_i32_1 = arith.constant 0 : i32
    return %arg0, %c0_i32, %c0_i32_0 : i32, i32, i32
  }
  func.func @transform_4(%arg0: i32, %arg1: i32) -> (i32, i32, i32) {
    %c0_i32 = arith.constant 0 : i32
    %c0_i32_0 = arith.constant 0 : i32
    %c0_i32_1 = arith.constant 0 : i32
    return %arg0, %c0_i32, %c0_i32_0 : i32, i32, i32
  }
}

</mosaic_0001>

<llo_original>
// kernel: myloss1.1
$region0: #{myloss1.1}
  #allocation0 [shape = 'u32[]', space=smem, size = 0x4, offset = 0x4, fixed_abs, tag = 'smem constant byte address 0x4 - core index']
  #allocation1 [shape = 'u32[144,128]{1,0:T(1,128)}', space=vmem, size = 0x12000, scoped, tag = 'internal scratch']
  #allocation2 [shape = 's32[1]{0:T(128)S(6)}', space=smem, size = 0x200, scoped, tag = 'scoped memory for myloss1.1']
  %s0 = inlined_call_operand.vmem [shape: f32[3], index: 0, kind: input, shape index: {}]
  %s1 = inlined_call_operand.<no memory space> [shape: s32[1], index: 1, kind: input, shape index: {}]
  %s2 = inlined_call_operand.vmem [shape: f32[32,128], index: 2, kind: input, shape index: {}]
  %s3 = inlined_call_operand.vmem [shape: f32[2,1,128], index: 3, kind: output, shape index: {0}]
  %s4 = inlined_call_operand.vmem [shape: f32[2,1,128], index: 4, kind: output, shape index: {1}]
  %5 = xla_tuple %s3, %s4
  %s6 = sld [smem:[#allocation0]]
  $region61: #{myloss1.1} parent=0
    _
  %s8 = ssub.s32 1, %s6
  %s9 = scalar_select 0, %s8, %s6
  %10 = sst [smem:[#allocation2]] %s1
  $region1: #{myloss1.1} parent=0
    #allocation3 [shape = 'u8[512]{0}', space=smem, size = 0x200, scoped, tag = 'input window, operand 0, single buffered']
    #allocation4 [shape = 's32[2]{0}', space=sflag, size = 0x8, scoped, tag = 'scoped memory for myloss1.1']
    %11 = vsyncpa [#allocation4], 0
    loop: start=0, step=1, limit=4
    $region2: #{myloss1.1} parent=1 // loop_pre_header
      _
    $region3: #{myloss1.1} parent=1 // loop_header
      %s13 = sphi 0, %s17
      %p14 = scmp.ge.s32.totalorder %s13, 4
      %s20 = sphi 0, %s32
      %s21 = sphi 0, %s28
      %s22 = sphi 0, %s20
      %s23 = sphi 0, %s21
      %s24 = sphi 0, %s22
      %s25 = sphi 0, %s23
      %s33 = sphi 0, %s33
      %s35 = sphi 0, %s33
      %s36 = sphi 0, %s35
      %s50 = sphi 0, %s36
      %s54 = sphi 0, %s54
      %s56 = sphi 0, %s54
      %s57 = sphi 0, %s56
      %s71 = sphi 0, %s57
      %s79 = sphi 0, %s81
      %s82 = sphi 0, %s79
      %s83 = sphi 0, %s82
      %s99 = sphi 0, %s83
      %s105 = sphi 0, %s107
      %s108 = sphi 0, %s105
      %s109 = sphi 0, %s108
      %s125 = sphi 0, %s109
      %s131 = sphi 0, %s133
      %s134 = sphi 0, %s131
      %s135 = sphi 0, %s134
      %s151 = sphi 0, %s135
    $region4: #{myloss1.1} parent=1 // loop_header_branch
      %16 = sbr.rel (%p14) target = $region8
    $region5: #{myloss1.1} parent=1 // loop_body
      %s18 = ssub.s32 %s13, 1
      %s19 = ssub.s32 %s13, 2
      %s26 = sadd.s32 1, %s21
      %p27 = scmp.ge.s32.totalorder %s26, 1
      %s28 = scalar_select %p27, 0, %s26
      %s29 = sadd.s32 1, %s20
      %s30 = scalar_select %p27, %s29, %s20
      %p31 = scmp.ge.s32.totalorder %s30, 2
      %s32 = scalar_select %p31, 0, %s30
      %s34 = sadd.s32 %s33, 1
      %p37 = scmp.eq.s32.totalorder %s13, 1
      %p38 = scmp.ne.s32.totalorder %s33, %s35
      %p39 = scmp.eq.s32.totalorder %s13, 0
      %p40 = por %p38, %p39
      %p41 = scmp.ne.s32.totalorder %s33, %s35
      %p42 = scmp.eq.s32.totalorder %s18, 1
      %p43 = por %p41, %p42
      %p44 = scmp.ne.s32.totalorder %s35, %s36
      %p45 = scmp.eq.s32.totalorder %s18, 0
      %p46 = por %p44, %p45
      %p47 = scmp.ne.s32.totalorder %s35, %s36
      %p48 = scmp.eq.s32.totalorder %s19, 1
      %p49 = por %p47, %p48
      %p51 = scmp.ne.s32.totalorder %s36, %s50
      %p52 = scmp.eq.s32.totalorder %s19, 0
      %p53 = por %p51, %p52
      %s55 = sadd.s32 %s54, 1
      %p58 = scmp.eq.s32.totalorder %s13, 1
      %p59 = scmp.ne.s32.totalorder %s54, %s56
      %p60 = scmp.eq.s32.totalorder %s13, 0
      %p61 = por %p59, %p60
      %p62 = scmp.ne.s32.totalorder %s54, %s56
      %p63 = scmp.eq.s32.totalorder %s18, 1
      %p64 = por %p62, %p63
      %p65 = scmp.ne.s32.totalorder %s56, %s57
      %p66 = scmp.eq.s32.totalorder %s18, 0
      %p67 = por %p65, %p66
      %p68 = scmp.ne.s32.totalorder %s56, %s57
      %p69 = scmp.eq.s32.totalorder %s19, 1
      %p70 = por %p68, %p69
      %p72 = scmp.ne.s32.totalorder %s57, %s71
      %p73 = scmp.eq.s32.totalorder %s19, 0
      %p74 = por %p72, %p73
      %s75 = sadd.s32 %s20, %s21
      %s76 = sadd.s32 %s32, %s28
      %s77 = ssub.s32 %s75, %s76
      %p78 = scmp.eq.s32.totalorder %s77, 0
      %s80 = sadd.s32 %s79, 1
      %s81 = scalar_select %p78, %s79, %s80
      %p84 = pneg %p78
      %p85 = scmp.eq.s32.totalorder %s13, 1
      %p86 = por %p84, %p85
      %p87 = scmp.ne.s32.totalorder %s79, %s82
      %p88 = scmp.eq.s32.totalorder %s13, 0
      %p89 = por %p87, %p88
      %p90 = scmp.ne.s32.totalorder %s79, %s82
      %p91 = scmp.eq.s32.totalorder %s18, 1
      %p92 = por %p90, %p91
      %p93 = scmp.ne.s32.totalorder %s82, %s83
      %p94 = scmp.eq.s32.totalorder %s18, 0
      %p95 = por %p93, %p94
      %p96 = scmp.ne.s32.totalorder %s82, %s83
      %p97 = scmp.eq.s32.totalorder %s19, 1
      %p98 = por %p96, %p97
      %p100 = scmp.ne.s32.totalorder %s83, %s99
      %p101 = scmp.eq.s32.totalorder %s19, 0
      %p102 = por %p100, %p101
      %s103 = ssub.s32 %s20, %s32
      %p104 = scmp.eq.s32.totalorder %s103, 0
      %s106 = sadd.s32 %s105, 1
      %s107 = scalar_select %p104, %s105, %s106
      %p110 = pneg %p104
      %p111 = scmp.eq.s32.totalorder %s13, 1
      %p112 = por %p110, %p111
      %p113 = scmp.ne.s32.totalorder %s105, %s108
      %p114 = scmp.eq.s32.totalorder %s13, 0
      %p115 = por %p113, %p114
      %p116 = scmp.ne.s32.totalorder %s105, %s108
      %p117 = scmp.eq.s32.totalorder %s18, 1
      %p118 = por %p116, %p117
      %p119 = scmp.ne.s32.totalorder %s108, %s109
      %p120 = scmp.eq.s32.totalorder %s18, 0
      %p121 = por %p119, %p120
      %p122 = scmp.ne.s32.totalorder %s108, %s109
      %p123 = scmp.eq.s32.totalorder %s19, 1
      %p124 = por %p122, %p123
      %p126 = scmp.ne.s32.totalorder %s109, %s125
      %p127 = scmp.eq.s32.totalorder %s19, 0
      %p128 = por %p126, %p127
      %s129 = ssub.s32 %s20, %s32
      %p130 = scmp.eq.s32.totalorder %s129, 0
      %s132 = sadd.s32 %s131, 1
      %s133 = scalar_select %p130, %s131, %s132
      %p136 = pneg %p130
      %p137 = scmp.eq.s32.totalorder %s13, 1
      %p138 = por %p136, %p137
      %p139 = scmp.ne.s32.totalorder %s131, %s134
      %p140 = scmp.eq.s32.totalorder %s13, 0
      %p141 = por %p139, %p140
      %p142 = scmp.ne.s32.totalorder %s131, %s134
      %p143 = scmp.eq.s32.totalorder %s18, 1
      %p144 = por %p142, %p143
      %p145 = scmp.ne.s32.totalorder %s134, %s135
      %p146 = scmp.eq.s32.totalorder %s18, 0
      %p147 = por %p145, %p146
      %p148 = scmp.ne.s32.totalorder %s134, %s135
      %p149 = scmp.eq.s32.totalorder %s19, 1
      %p150 = por %p148, %p149
      %p152 = scmp.ne.s32.totalorder %s135, %s151
      %p153 = scmp.eq.s32.totalorder %s19, 0
      %p154 = por %p152, %p153
      %p155 = scmp.le.s32.totalorder 1, %s13
      %p156 = scmp.lt.s32.totalorder %s13, 3
      %p157 = pnand %p155, %p156
      %p158 = pneg %p157
      // Predicated region
      $region9: #{myloss1.1} parent=5 // pred_check
        _
      $region10: #{myloss1.1} parent=5 // pred_check_branch
        %160 = sbr.rel (%p157) target = $region12
      $region11: #{myloss1.1} parent=5 // pred_region
        %s161 = ssub.s32 %s13, 1
        // Predicated region
        $region13: #{myloss1.1} parent=11 // pred_check
          %p162 = pneg %p46
        $region14: #{myloss1.1} parent=11 // pred_check_branch
          %164 = sbr.rel (%p162) target = $region16
        $region15: #{myloss1.1} parent=11 // pred_region
          %s166 = ssub.s32 16, 16
          %167 = vsyncadd [#allocation4], %s166
          %s169 = sshll.u32 %s0, 4
          %s170 = int_to_ptr.vmem [resolvable:$true] %s169
          %172 = dma.vmem_to_smem %s170, 16, [#allocation3], [#allocation4]
        $region16: #{myloss1.1} parent=11 // pred_fallthru
          _
        // Predicated region
        $region17: #{myloss1.1} parent=11 // pred_check
          %p173 = pneg %p67
        $region18: #{myloss1.1} parent=11 // pred_check_branch
          %175 = sbr.rel (%p173) target = $region20
        $region19: #{myloss1.1} parent=11 // pred_region
          _
        $region20: #{myloss1.1} parent=11 // pred_fallthru
          _
      $region12: #{myloss1.1} parent=5 // pred_fallthru
        _
      %p176 = scmp.lt.s32.totalorder %s13, 2
      // Predicated region
      $region21: #{myloss1.1} parent=5 // pred_check
        %p177 = pneg %p176
      $region22: #{myloss1.1} parent=5 // pred_check_branch
        %179 = sbr.rel (%p177) target = $region24
      $region23: #{myloss1.1} parent=5 // pred_region
        // Predicated region
        $region25: #{myloss1.1} parent=23 // pred_check
          %p180 = pneg %p89
        $region26: #{myloss1.1} parent=23 // pred_check_branch
          %182 = sbr.rel (%p180) target = $region28
        $region27: #{myloss1.1} parent=23 // pred_region
          %s183 = sadd.s32 %s20, %s21
          %s184 = smul.u32 2, %s183
          %p185 = scmp.lt.s32.totalorder %s184, 3
          %s186 = scalar_select %p185, %s184, 3
          %s187 = smul.addr %s186, 8
          %s188 = scalar_lea.vmem %s2, %s187
          %s189 = sadd.s32 %s20, %s21
          %s190 = smul.u32 2, %s189
        $region28: #{myloss1.1} parent=23 // pred_fallthru
          _
      $region24: #{myloss1.1} parent=5 // pred_fallthru
        _
      %p191 = scmp.le.s32.totalorder 1, %s13
      %p192 = scmp.lt.s32.totalorder %s13, 3
      %p193 = pnand %p191, %p192
      %p194 = pneg %p193
      // Predicated region
      $region29: #{myloss1.1} parent=5 // pred_check
        _
      $region30: #{myloss1.1} parent=5 // pred_check_branch
        %196 = sbr.rel (%p193) target = $region32
      $region31: #{myloss1.1} parent=5 // pred_region
        %s197 = ssub.s32 %s13, 1
        // Predicated region
        $region33: #{myloss1.1} parent=31 // pred_check
          %p198 = pneg %p46
        $region34: #{myloss1.1} parent=31 // pred_check_branch
          %200 = sbr.rel (%p198) target = $region36
        $region35: #{myloss1.1} parent=31 // pred_region
          %201 = dma.done [#allocation4], 16
        $region36: #{myloss1.1} parent=31 // pred_fallthru
          _
        %202 = sfence
        %p203 = pneg %p46
        %p204 = pneg %p43
        %p205 = pneg %p67
        %p206 = pneg %p64
        %s207 = sadd.s32 %s22, %s23
        %s208 = smul.u32 2, %s207
        %p209 = scmp.lt.s32.totalorder %s208, 3
        %s210 = scalar_select %p209, %s208, 3
        %s211 = smul.addr %s210, 8
        %s212 = scalar_lea.vmem %s2, %s211
        %p213 = pneg %p95
        %p214 = pneg %p92
        %p215 = pneg %p121
        %p216 = pneg %p118
        %p217 = scmp.lt.s32.totalorder %s22, 1
        %s218 = scalar_select %p217, %s22, 1
        %s219 = scalar_lea.vmem %s3, %s218
        %p220 = pneg %p147
        %p221 = pneg %p144
        %p222 = scmp.lt.s32.totalorder %s22, 1
        %s223 = scalar_select %p222, %s22, 1
        %s224 = scalar_lea.vmem %s4, %s223
        %s225 = sadd.s32 %s22, %s23
        %s226 = smul.u32 2, %s225
        %p227 = scmp.lt.s32.totalorder %s226, 3
        %s228 = scalar_select %p227, %s226, 3
        %s229 = smul.addr %s228, 8
        %s230 = scalar_lea.vmem %s2, %s229
        %s231 = sadd.s32 %s22, %s23
        %s232 = smul.u32 2, %s231
        %p233 = scmp.lt.s32.totalorder %s22, 1
        %s234 = scalar_select %p233, %s22, 1
        %s235 = scalar_lea.vmem %s3, %s234
        %p236 = scmp.lt.s32.totalorder %s22, 1
        %s237 = scalar_select %p236, %s22, 1
        %s238 = scalar_lea.vmem %s4, %s237
        %p239 = scmp.eq.s32.totalorder %s23, 0
        // Predicated region
        $region37: #{myloss1.1} parent=31 // pred_check
          %p240 = pneg %p239
        $region38: #{myloss1.1} parent=31 // pred_check_branch
          %242 = sbr.rel (%p240) target = $region40
        $region39: #{myloss1.1} parent=31 // pred_region
          %243 = vst [vmem:[%s235] sm:$0x1] 0.0
          %244 = vst [vmem:[%s238] sm:$0x1] 0.0
        $region40: #{myloss1.1} parent=31 // pred_fallthru
          _
        %s245 = sld [smem:[#allocation3]]
        %s246 = sld [smem:[#allocation3 + $0x1]]
        %s247 = sld [smem:[#allocation3 + $0x2]]
        %s248 = sld [smem:[#allocation2]]
        %v249 = vlaneseq
        %v250 = vshrl.u32 %v249, 7
        %v251 = vadd.s32 %v250, 8
        %v252 = vlaneseq
        %v253 = vand.u32 %v252, 127
        %v254 = vand.u32 %v253, 1
        %vm255 = vcmp.eq.s32.totalorder %v254, 0
        %v256 = vsel %vm255, 6.0, 0.6
        %v257 = vstv %s246
        %v258 = vstv %s247
        %v259 = vsel %vm255, %v257, %v258
        %v260 = vld [vmem:[%s230] sm:$0xff]
        %v261 = vld [vmem:[%s230 + $0x8] sm:$0xff]
        %v262 = vmul.f32 %v260, %v256
        %v263 = vmul.f32 %v261, %v256
        %v264 = vsub.f32 %v262, %v259
        %v265 = vsub.f32 %v263, %v259
        %v266 = vadd.f32 %v264, 1e-06
        %v267 = vadd.f32 %v265, 1e-06
        %v268 = vmul.f32 %v266, %v266
        %v269 = vmul.f32 %v267, %v267
        %272 = vrot.lane.b32.xlu0 %v268, 127
        %v273 = vpop.permute.xlu0 %272
        %274 = vrot.lane.b32.xlu0 %v269, 127
        %v275 = vpop.permute.xlu0 %274
        %v278 = vadd.f32 %v268, %v273
        %v279 = vadd.f32 %v269, %v275
        %v280 = vrsqrt.pop %v278
        %v281 = vmul.f32 %v278, %v280
        %vm282 = vcmp.eq.f32.partialorder %v278, inf
        %v283 = vsel %vm282, %v278, %v281
        %vm284 = vcmp.eq.f32.partialorder %v278, 0.0
        %v285 = vand.u32 %v278, 2147483648
        %v286 = vsel %vm284, %v285, %v283
        %v287 = vrsqrt.pop %v279
        %v288 = vmul.f32 %v279, %v287
        %vm289 = vcmp.eq.f32.partialorder %v279, inf
        %v290 = vsel %vm289, %v279, %v288
        %vm291 = vcmp.eq.f32.partialorder %v279, 0.0
        %v292 = vand.u32 %v279, 2147483648
        %v293 = vsel %vm291, %v292, %v290
        %v294 = vstv %s245
        %v295 = vsub.f32 %v286, %v294
        %v296 = vsub.f32 %v293, %v294
        %v297 = vmax.f32 %v295, 0.0
        %v298 = vmax.f32 %v296, 0.0
        %s299 = sadd.s32 %s22, %s23
        %s300 = smul.u32 %s299, 16
        %v301 = vstv %s300
        %v302 = vadd.s32 %v301, %v250
        %v303 = vadd.s32 %v301, %v251
        %v304 = vmul.u32 %v302, 128
        %v305 = vmul.u32 %v303, 128
        %v306 = vadd.s32 %v304, %v253
        %v307 = vadd.s32 %v305, %v253
        %v308 = vstv %s248
        %vm309 = vcmp.lt.s32.totalorder %v306, %v308
        %vm310 = vcmp.lt.s32.totalorder %v307, %v308
        %vm311 = vmand %vm255, %vm309
        %vm312 = vmand %vm255, %vm310
        %v313 = vsel %vm311, %v297, 0.0
        %v314 = vsel %vm312, %v298, 0.0
        %vm315 = vcmp.gt.f32.partialorder %v313, 0.0
        %vm316 = vcmp.gt.f32.partialorder %v314, 0.0
        %v317 = vsel %vm315, 1, 0
        %v318 = vsel %vm316, 1, 0
        %v319 = vcvt.s32.f32 %v317
        %v320 = vcvt.s32.f32 %v318
        %v321 = vld [vmem:[%s235] sm:$0x1]
        %v322 = vadd.f32 %v313, %v314
        %v323 = vrot.slane %v322, 4
        %v324 = vadd.f32 %v322, %v323
        %v325 = vrot.slane %v324, 2
        %v326 = vadd.f32 %v324, %v325
        %v327 = vrot.slane %v326, 1
        %v328 = vadd.f32 %v326, %v327
        %v329 = vadd.f32 %v321, %v328
        %330 = vst [vmem:[%s235] sm:$0x1] %v329
        %v331 = vld [vmem:[%s238] sm:$0x1]
        %v332 = vadd.f32 %v319, %v320
        %v333 = vrot.slane %v332, 4
        %v334 = vadd.f32 %v332, %v333
        %v335 = vrot.slane %v334, 2
        %v336 = vadd.f32 %v334, %v335
        %v337 = vrot.slane %v336, 1
        %v338 = vadd.f32 %v336, %v337
        %v339 = vadd.f32 %v331, %v338
        %340 = vst [vmem:[%s238] sm:$0x1] %v339
        %p341 = scmp.lt.s32.totalorder %s22, 1
        %s342 = scalar_select %p341, %s22, 1
        %s343 = scalar_lea.vmem %s3, %s342
        %p344 = scmp.lt.s32.totalorder %s22, 1
        %s345 = scalar_select %p344, %s22, 1
        %s346 = scalar_lea.vmem %s4, %s345
        // Predicated region
        $region41: #{myloss1.1} parent=31 // pred_check
          %p347 = pneg %p118
        $region42: #{myloss1.1} parent=31 // pred_check_branch
          %349 = sbr.rel (%p347) target = $region44
        $region43: #{myloss1.1} parent=31 // pred_region
          _
        $region44: #{myloss1.1} parent=31 // pred_fallthru
          _
        // Predicated region
        $region45: #{myloss1.1} parent=31 // pred_check
          %p350 = pneg %p144
        $region46: #{myloss1.1} parent=31 // pred_check_branch
          %352 = sbr.rel (%p350) target = $region48
        $region47: #{myloss1.1} parent=31 // pred_region
          _
        $region48: #{myloss1.1} parent=31 // pred_fallthru
          _
      $region32: #{myloss1.1} parent=5 // pred_fallthru
        _
      %p353 = scmp.le.s32.totalorder 2, %s13
      // Predicated region
      $region49: #{myloss1.1} parent=5 // pred_check
        %p354 = pneg %p353
      $region50: #{myloss1.1} parent=5 // pred_check_branch
        %356 = sbr.rel (%p354) target = $region52
      $region51: #{myloss1.1} parent=5 // pred_region
        %s357 = ssub.s32 %s13, 2
        // Predicated region
        $region53: #{myloss1.1} parent=51 // pred_check
          %p358 = pneg %p124
        $region54: #{myloss1.1} parent=51 // pred_check_branch
          %360 = sbr.rel (%p358) target = $region56
        $region55: #{myloss1.1} parent=51 // pred_region
          %p361 = scmp.lt.s32.totalorder %s24, 1
          %s362 = scalar_select %p361, %s24, 1
          %s363 = scalar_lea.vmem %s3, %s362
        $region56: #{myloss1.1} parent=51 // pred_fallthru
          _
        // Predicated region
        $region57: #{myloss1.1} parent=51 // pred_check
          %p364 = pneg %p150
        $region58: #{myloss1.1} parent=51 // pred_check_branch
          %366 = sbr.rel (%p364) target = $region60
        $region59: #{myloss1.1} parent=51 // pred_region
          %p367 = scmp.lt.s32.totalorder %s24, 1
          %s368 = scalar_select %p367, %s24, 1
          %s369 = scalar_lea.vmem %s4, %s368
        $region60: #{myloss1.1} parent=51 // pred_fallthru
          _
      $region52: #{myloss1.1} parent=5 // pred_fallthru
        _
    $region6: #{myloss1.1} parent=1 // loop_footer
      %s17 = sadd.s32 1, %s13
    $region7: #{myloss1.1} parent=1 // loop_footer_branch
      %12 = sbr.rel target = $region3
    $region8: #{myloss1.1} parent=1 // loop_exit
      _
    %370 = vsyncpa [#allocation4], 1
    %s371 = scalar_lea.sflag [#allocation4], 1
    %372 = vsyncpa %s371, 1

</llo_original>
